<compile_context>
chip_gen: v7x
topology: tpu7x:2x2x1
jax: 0.10.0
libtpu: 0.0.40
codegen_flags: <defaults>
</compile_context>

<pallas_src>
import math
import functools

import jax
import jax.numpy as jnp
from jax.experimental import pallas as pl
from jax.experimental.pallas import tpu as pltpu


def _flash_kernel(q_ref, k_ref, v_ref, o_ref, m_scr, l_scr, acc_scr,
                  *, heads, head_dim):
    """One (group, q-tile, kv-tile) step of online-softmax attention.

    q_ref:        (tq, heads*head_dim) bf16, pre-scaled by 1/sqrt(head_dim)
    k_ref/v_ref:  (tk, heads*head_dim) bf16
    o_ref:        (tq, heads*head_dim) output dtype
    m_scr/l_scr:  (tq, heads) f32 running max / denom
    acc_scr:      (tq, heads*head_dim) f32 running accumulator
    Grid axis 2 (kv tiles) is the reduction axis.
    """
    kv = pl.program_id(2)

    @pl.when(kv == 0)
    def _init():
        m_scr[...] = jnp.full_like(m_scr, -jnp.inf)
        l_scr[...] = jnp.zeros_like(l_scr)
        acc_scr[...] = jnp.zeros_like(acc_scr)

    D = head_dim
    for h in range(heads):                      # static unroll; heads is small
        lo, hi = h * D, (h + 1) * D
        q_h = q_ref[:, lo:hi]                   # (tq, D) bf16 (already scaled)
        k_h = k_ref[:, lo:hi]                   # (tk, D) bf16
        # QK^T: contract over the last dims -> no K transpose is materialized.
        s = jax.lax.dot_general(
            q_h, k_h, (((1,), (1,)), ((), ())),
            preferred_element_type=jnp.float32)          # (tq, tk) f32

        m_prev = m_scr[:, h:h + 1]                        # (tq, 1)
        m_new = jnp.maximum(m_prev, jnp.max(s, axis=-1, keepdims=True))
        alpha = jnp.exp(m_prev - m_new)
        p = jnp.exp(s - m_new)                            # f32 softmax math
        l_scr[:, h:h + 1] = alpha * l_scr[:, h:h + 1] + jnp.sum(
            p, axis=-1, keepdims=True)
        acc_scr[:, lo:hi] = alpha * acc_scr[:, lo:hi] + jnp.dot(
            p.astype(jnp.bfloat16), v_ref[:, lo:hi],
            preferred_element_type=jnp.float32)
        m_scr[:, h:h + 1] = m_new

    @pl.when(kv == pl.num_programs(2) - 1)
    def _finalize():
        for h in range(heads):
            lo, hi = h * D, (h + 1) * D
            # Exact division: runs once per (group, q-tile), off critical path.
            o_ref[:, lo:hi] = (
                acc_scr[:, lo:hi] / l_scr[:, h:h + 1]).astype(o_ref.dtype)


def _pick_tile(size, target):
    """Largest sublane-friendly tile <= target that divides `size`, else full.

    NOTE: for prime / awkward S this returns the full sequence length, which is
    legal but can inflate the (tq, tk) intermediates.
    """
    if size <= target:
        return size
    for t in (1024, 768, 512, 384, 256, 128, 64, 32, 16, 8):
        if t <= target and size % t == 0:
            return t
    return size


def _ensure_parallel(tq, S, outer, min_tile=128):
    """Keep >= 2 independent (group, q-tile) units for dual-TensorCore chips."""
    while (outer * (S // tq) < 2 and tq >= 2 * min_tile and tq % 2 == 0
           and (tq // 2) % 8 == 0 and S % (tq // 2) == 0):
        tq //= 2
    return tq


def multi_head_attention(q, k, v, head_num):
    """q, k, v: (B, S, F).  Returns (B*head_num, S, F//head_num), matching
    MultiHeadAttention.forward (which does not reshape back)."""
    B, S, F = q.shape
    if F % head_num != 0:
        raise ValueError("in_features must be divisible by head_num")
    H = head_num
    D = F // H
    BH = B * H
    out_dtype = q.dtype
    scale = 1.0 / math.sqrt(D)

    # Single wrapper-side bf16 cast (softmax scale folded into the q cast).
    # K/V are re-streamed S/tq times by the kernel, so halving their width and
    # removing per-step casts/score-scaling is a direct HBM + VPU win.
    q_in = (q * scale).astype(jnp.bfloat16)
    k_in = k.astype(jnp.bfloat16)
    v_in = v.astype(jnp.bfloat16)

    # Direct path: head slice is lane-aligned (D % 128 == 0) or single head.
    direct = (D % 128 == 0) or (H == 1)

    if direct:
        tq = _pick_tile(S, 512)
        tk = _pick_tile(S, 1024)
        heads, width, outer = 1, D, BH
        tq = _ensure_parallel(tq, S, outer)
        q_spec = pl.BlockSpec((None, tq, D), lambda g, qi, ki: (g // H, qi, g % H))
        k_spec = pl.BlockSpec((None, tk, D), lambda g, qi, ki: (g // H, ki, g % H))
        v_spec = pl.BlockSpec((None, tk, D), lambda g, qi, ki: (g // H, ki, g % H))
        out_spec = pl.BlockSpec((None, tq, D), lambda g, qi, ki: (g, qi, 0))
        out_shape = jax.ShapeDtypeStruct((BH, S, D), out_dtype)
    else:
        # Lane-dense small-head_dim path: heads are already contiguous along
        # the feature (lane) axis of (B, S, F), so no input transpose at all.
        # Per-head math uses static lane slices inside the kernel; the output
        # is a dense (tq, F) slab, split into heads once in the wrapper.
        tq = _pick_tile(S, 256)
        tk = _pick_tile(S, 512)
        heads, width, outer = H, F, B
        tq = _ensure_parallel(tq, S, outer)
        q_spec = pl.BlockSpec((None, tq, F), lambda b, qi, ki: (b, qi, 0))
        k_spec = pl.BlockSpec((None, tk, F), lambda b, qi, ki: (b, ki, 0))
        v_spec = pl.BlockSpec((None, tk, F), lambda b, qi, ki: (b, ki, 0))
        out_spec = pl.BlockSpec((None, tq, F), lambda b, qi, ki: (b, qi, 0))
        out_shape = jax.ShapeDtypeStruct((B, S, F), out_dtype)

    kernel = functools.partial(_flash_kernel, heads=heads, head_dim=D)

    itemsize_out = jnp.dtype(out_dtype).itemsize
    cost = pl.CostEstimate(
        flops=4 * BH * S * S * D,
        transcendentals=BH * S * S,
        bytes_accessed=int(2 * BH * (S // tq) * S * D * 2      # K + V (bf16, re-read)
                           + BH * S * D * 2                    # Q (bf16)
                           + BH * S * D * itemsize_out))       # output

    out = pl.pallas_call(
        kernel,
        out_shape=out_shape,
        grid_spec=pltpu.PrefetchScalarGridSpec(
            num_scalar_prefetch=0,
            grid=(outer, S // tq, S // tk),
            in_specs=[q_spec, k_spec, v_spec],
            out_specs=out_spec,
            scratch_shapes=[
                pltpu.VMEM((tq, heads), jnp.float32),   # running max m
                pltpu.VMEM((tq, heads), jnp.float32),   # running denom l
                pltpu.VMEM((tq, width), jnp.float32),   # running accumulator
            ]),
        compiler_params=pltpu.CompilerParams(
            # kv axis is the online-softmax reduction -> "arbitrary";
            # group / q-tile axes are independent -> megacore parallel.
            dimension_semantics=("parallel", "parallel", "arbitrary"),
            vmem_limit_bytes=48 * 1024 * 1024),
        cost_estimate=cost,
    )(q_in, k_in, v_in)

    if direct:
        return out
    # Lane-dense (B, S, F) output slab -> module's batched-heads layout.
    return out.reshape(B, S, H, D).transpose(0, 2, 1, 3).reshape(BH, S, D)


def _reference(q, k, v, head_num):
    B, S, F = q.shape
    D = F // head_num

    def to_batches(x):
        return (x.reshape(B, S, head_num, D).transpose(0, 2, 1, 3)
                 .reshape(B * head_num, S, D))

    qb, kb, vb = to_batches(q), to_batches(k), to_batches(v)
    scores = jnp.einsum("bqd,bkd->bqk", qb, kb) / math.sqrt(D)
    attn = jax.nn.softmax(scores, axis=-1)
    return jnp.einsum("bqk,bkd->bqd", attn, vb)


def _check(B, S, F, H, key):
    kq, kk, kv_ = jax.random.split(key, 3)
    q = jax.random.normal(kq, (B, S, F), dtype=jnp.float32)
    k = jax.random.normal(kk, (B, S, F), dtype=jnp.float32)
    v = jax.random.normal(kv_, (B, S, F), dtype=jnp.float32)

    out = jax.block_until_ready(multi_head_attention(q, k, v, H))
    ref = _reference(q, k, v, H)
    assert out.shape == (B * H, S, F // H), out.shape
    # bf16 MXU operands (f32 accumulation) -> loosened tolerance.
    assert jnp.allclose(out, ref, atol=2e-2, rtol=2e-2), \
        float(jnp.max(jnp.abs(out - ref)))


if __name__ == "__main__":
    key = jax.random.PRNGKey(0)
    k1, k2, k3 = jax.random.split(key, 3)
    # Small shape consistent with the module: batch=2, seq=8, in_features=32, 4 heads.
    _check(B=2, S=8, F=32, H=4, key=k1)
    # Lane-aligned head_dim -> direct (no-transpose) path, multiple q/kv tiles.
    _check(B=1, S=512, F=256, H=2, key=k2)
    # Small head_dim with multiple q/kv tiles -> lane-dense grouped-head path.
    _check(B=2, S=512, F=32, H=4, key=k3)
    print("KERNEL_OK")
</pallas_src>

<mosaic_0001>
module attributes {stable_mosaic.version = 11 : i64} {
  func.func @_flash_kernel(%arg0: i32, %arg1: i32, %arg2: i32, %arg3: memref<1x8x32xbf16, #tpu.memory_space<vmem>>, %arg4: memref<1x8x32xbf16, #tpu.memory_space<vmem>>, %arg5: memref<1x8x32xbf16, #tpu.memory_space<vmem>>, %arg6: memref<1x8x32xf32, #tpu.memory_space<vmem>>, %arg7: memref<8x4xf32, #tpu.memory_space<vmem>>, %arg8: memref<8x4xf32, #tpu.memory_space<vmem>>, %arg9: memref<8x32xf32, #tpu.memory_space<vmem>>) attributes {dimension_semantics = [#tpu.dimension_semantics<parallel>, #tpu.dimension_semantics<parallel>, #tpu.dimension_semantics<arbitrary>], iteration_bounds = array<i64: 2, 1, 1>, scalar_prefetch = 0 : i64, scratch_operands = 3 : i64, tpu.core_type = #tpu.core_type<tc>, window_params = [{transform_indices = @transform_0, window_bounds = array<i64: 1, 8, 32>}, {transform_indices = @transform_1, window_bounds = array<i64: 1, 8, 32>}, {transform_indices = @transform_2, window_bounds = array<i64: 1, 8, 32>}, {transform_indices = @transform_3, window_bounds = array<i64: 1, 8, 32>}]} {
    %c0_i32 = arith.constant 0 : i32
    %0 = arith.cmpi eq, %arg2, %c0_i32 : i32
    %1 = arith.extui %0 : i1 to i32
    %c0_i32_0 = arith.constant 0 : i32
    %2 = arith.cmpi ne, %1, %c0_i32_0 : i32
    scf.if %2 {
      %cst_95 = arith.constant 0xFF800000 : f32
      %126 = vector.broadcast %cst_95 : f32 to vector<8x4xf32>
      %c0_96 = arith.constant 0 : index
      %c0_97 = arith.constant 0 : index
      %127 = vector.load %arg7[%c0_96, %c0_97] : memref<8x4xf32, #tpu.memory_space<vmem>>, vector<8x4xf32>
      tpu.vector_store %arg7[%c0_96, %c0_97], %126 {strides = array<i32>} : memref<8x4xf32, #tpu.memory_space<vmem>>, vector<8x4xf32>,
      %cst_98 = arith.constant 0.000000e+00 : f32
      %128 = vector.broadcast %cst_98 : f32 to vector<8x4xf32>
      %c0_99 = arith.constant 0 : index
      %c0_100 = arith.constant 0 : index
      %129 = vector.load %arg8[%c0_99, %c0_100] : memref<8x4xf32, #tpu.memory_space<vmem>>, vector<8x4xf32>
      tpu.vector_store %arg8[%c0_99, %c0_100], %128 {strides = array<i32>} : memref<8x4xf32, #tpu.memory_space<vmem>>, vector<8x4xf32>,
      %cst_101 = arith.constant 0.000000e+00 : f32
      %130 = vector.broadcast %cst_101 : f32 to vector<8x32xf32>
      %c0_102 = arith.constant 0 : index
      %c0_103 = arith.constant 0 : index
      %131 = vector.load %arg9[%c0_102, %c0_103] : memref<8x32xf32, #tpu.memory_space<vmem>>, vector<8x32xf32>
      tpu.vector_store %arg9[%c0_102, %c0_103], %130 {strides = array<i32>} : memref<8x32xf32, #tpu.memory_space<vmem>>, vector<8x32xf32>,
    } else {
    }
    %c0 = arith.constant 0 : index
    %c0_1 = arith.constant 0 : index
    %c0_2 = arith.constant 0 : index
    %3 = vector.load %arg3[%c0, %c0_1, %c0_2] : memref<1x8x32xbf16, #tpu.memory_space<vmem>>, vector<1x8x8xbf16>
    %4 = vector.shape_cast %3 : vector<1x8x8xbf16> to vector<8x8xbf16>
    %c0_3 = arith.constant 0 : index
    %c0_4 = arith.constant 0 : index
    %c0_5 = arith.constant 0 : index
    %5 = vector.load %arg4[%c0_3, %c0_4, %c0_5] : memref<1x8x32xbf16, #tpu.memory_space<vmem>>, vector<1x8x8xbf16>
    %6 = vector.shape_cast %5 : vector<1x8x8xbf16> to vector<8x8xbf16>
    %cst = arith.constant dense<0.000000e+00> : vector<8x8xf32>
    %7 = tpu.matmul %4, %6, %cst {dimension_numbers = #tpu.dot_dimension_numbers<[1], [1], [0], [0], [0, 0, 1, 0], [], []>} : vector<8x8xbf16>, vector<8x8xbf16>, vector<8x8xf32> -> vector<8x8xf32>
    %c0_6 = arith.constant 0 : index
    %c0_7 = arith.constant 0 : index
    %8 = vector.load %arg7[%c0_6, %c0_7] : memref<8x4xf32, #tpu.memory_space<vmem>>, vector<8x1xf32>
    %cst_8 = arith.constant dense<0xFF800000> : vector<8xf32>
    %9 = vector.multi_reduction <maximumf>, %7, %cst_8 [1] : vector<8x8xf32> to vector<8xf32>
    %10 = vector.shape_cast %9 : vector<8xf32> to vector<8x1xf32>
    %11 = arith.maximumf %8, %10 : vector<8x1xf32>
    %12 = arith.subf %8, %11 : vector<8x1xf32>
    %13 = math.exp %12 : vector<8x1xf32>
    %14 = vector.broadcast %11 : vector<8x1xf32> to vector<8x8xf32>
    %15 = arith.subf %7, %14 : vector<8x8xf32>
    %16 = math.exp %15 : vector<8x8xf32>
    %c0_9 = arith.constant 0 : index
    %c0_10 = arith.constant 0 : index
    %17 = vector.load %arg8[%c0_9, %c0_10] : memref<8x4xf32, #tpu.memory_space<vmem>>, vector<8x1xf32>
    %18 = arith.mulf %13, %17 : vector<8x1xf32>
    %cst_11 = arith.constant dense<0.000000e+00> : vector<8xf32>
    %19 = vector.multi_reduction <add>, %16, %cst_11 [1] : vector<8x8xf32> to vector<8xf32>
    %20 = vector.shape_cast %19 : vector<8xf32> to vector<8x1xf32>
    %21 = arith.addf %18, %20 : vector<8x1xf32>
    %c0_12 = arith.constant 0 : index
    %c0_13 = arith.constant 0 : index
    %22 = vector.load %arg8[%c0_12, %c0_13] : memref<8x4xf32, #tpu.memory_space<vmem>>, vector<8x1xf32>
    tpu.vector_store %arg8[%c0_12, %c0_13], %21 {strides = array<i32>} : memref<8x4xf32, #tpu.memory_space<vmem>>, vector<8x1xf32>,
    %c0_14 = arith.constant 0 : index
    %c0_15 = arith.constant 0 : index
    %23 = vector.load %arg9[%c0_14, %c0_15] : memref<8x32xf32, #tpu.memory_space<vmem>>, vector<8x8xf32>
    %24 = vector.broadcast %13 : vector<8x1xf32> to vector<8x8xf32>
    %25 = arith.mulf %24, %23 : vector<8x8xf32>
    %26 = arith.truncf %16 : vector<8x8xf32> to vector<8x8xbf16>
    %c0_16 = arith.constant 0 : index
    %c0_17 = arith.constant 0 : index
    %c0_18 = arith.constant 0 : index
    %27 = vector.load %arg5[%c0_16, %c0_17, %c0_18] : memref<1x8x32xbf16, #tpu.memory_space<vmem>>, vector<1x8x8xbf16>
    %28 = vector.shape_cast %27 : vector<1x8x8xbf16> to vector<8x8xbf16>
    %cst_19 = arith.constant dense<0.000000e+00> : vector<8x8xf32>
    %29 = tpu.matmul %26, %28, %cst_19 {dimension_numbers = #tpu.dot_dimension_numbers<[1], [0], [0], [1], [0, 0, 1, 1], [], []>} : vector<8x8xbf16>, vector<8x8xbf16>, vector<8x8xf32> -> vector<8x8xf32>
    %30 = arith.addf %25, %29 : vector<8x8xf32>
    %c0_20 = arith.constant 0 : index
    %c0_21 = arith.constant 0 : index
    %31 = vector.load %arg9[%c0_20, %c0_21] : memref<8x32xf32, #tpu.memory_space<vmem>>, vector<8x8xf32>
    tpu.vector_store %arg9[%c0_20, %c0_21], %30 {strides = array<i32>} : memref<8x32xf32, #tpu.memory_space<vmem>>, vector<8x8xf32>,
    %c0_22 = arith.constant 0 : index
    %c0_23 = arith.constant 0 : index
    %32 = vector.load %arg7[%c0_22, %c0_23] : memref<8x4xf32, #tpu.memory_space<vmem>>, vector<8x1xf32>
    tpu.vector_store %arg7[%c0_22, %c0_23], %11 {strides = array<i32>} : memref<8x4xf32, #tpu.memory_space<vmem>>, vector<8x1xf32>,
    %c0_24 = arith.constant 0 : index
    %c0_25 = arith.constant 0 : index
    %c8 = arith.constant 8 : index
    %33 = vector.load %arg3[%c0_24, %c0_25, %c8] : memref<1x8x32xbf16, #tpu.memory_space<vmem>>, vector<1x8x8xbf16>
    %34 = vector.shape_cast %33 : vector<1x8x8xbf16> to vector<8x8xbf16>
    %c0_26 = arith.constant 0 : index
    %c0_27 = arith.constant 0 : index
    %c8_28 = arith.constant 8 : index
    %35 = vector.load %arg4[%c0_26, %c0_27, %c8_28] : memref<1x8x32xbf16, #tpu.memory_space<vmem>>, vector<1x8x8xbf16>
    %36 = vector.shape_cast %35 : vector<1x8x8xbf16> to vector<8x8xbf16>
    %cst_29 = arith.constant dense<0.000000e+00> : vector<8x8xf32>
    %37 = tpu.matmul %34, %36, %cst_29 {dimension_numbers = #tpu.dot_dimension_numbers<[1], [1], [0], [0], [0, 0, 1, 0], [], []>} : vector<8x8xbf16>, vector<8x8xbf16>, vector<8x8xf32> -> vector<8x8xf32>
    %c0_30 = arith.constant 0 : index
    %c1 = arith.constant 1 : index
    %38 = vector.load %arg7[%c0_30, %c1] : memref<8x4xf32, #tpu.memory_space<vmem>>, vector<8x1xf32>
    %cst_31 = arith.constant dense<0xFF800000> : vector<8xf32>
    %39 = vector.multi_reduction <maximumf>, %37, %cst_31 [1] : vector<8x8xf32> to vector<8xf32>
    %40 = vector.shape_cast %39 : vector<8xf32> to vector<8x1xf32>
    %41 = arith.maximumf %38, %40 : vector<8x1xf32>
    %42 = arith.subf %38, %41 : vector<8x1xf32>
    %43 = math.exp %42 : vector<8x1xf32>
    %44 = vector.broadcast %41 : vector<8x1xf32> to vector<8x8xf32>
    %45 = arith.subf %37, %44 : vector<8x8xf32>
    %46 = math.exp %45 : vector<8x8xf32>
    %c0_32 = arith.constant 0 : index
    %c1_33 = arith.constant 1 : index
    %47 = vector.load %arg8[%c0_32, %c1_33] : memref<8x4xf32, #tpu.memory_space<vmem>>, vector<8x1xf32>
    %48 = arith.mulf %43, %47 : vector<8x1xf32>
    %cst_34 = arith.constant dense<0.000000e+00> : vector<8xf32>
    %49 = vector.multi_reduction <add>, %46, %cst_34 [1] : vector<8x8xf32> to vector<8xf32>
    %50 = vector.shape_cast %49 : vector<8xf32> to vector<8x1xf32>
    %51 = arith.addf %48, %50 : vector<8x1xf32>
    %c0_35 = arith.constant 0 : index
    %c1_36 = arith.constant 1 : index
    %52 = vector.load %arg8[%c0_35, %c1_36] : memref<8x4xf32, #tpu.memory_space<vmem>>, vector<8x1xf32>
    tpu.vector_store %arg8[%c0_35, %c1_36], %51 {strides = array<i32>} : memref<8x4xf32, #tpu.memory_space<vmem>>, vector<8x1xf32>,
    %c0_37 = arith.constant 0 : index
    %c8_38 = arith.constant 8 : index
    %53 = vector.load %arg9[%c0_37, %c8_38] : memref<8x32xf32, #tpu.memory_space<vmem>>, vector<8x8xf32>
    %54 = vector.broadcast %43 : vector<8x1xf32> to vector<8x8xf32>
    %55 = arith.mulf %54, %53 : vector<8x8xf32>
    %56 = arith.truncf %46 : vector<8x8xf32> to vector<8x8xbf16>
    %c0_39 = arith.constant 0 : index
    %c0_40 = arith.constant 0 : index
    %c8_41 = arith.constant 8 : index
    %57 = vector.load %arg5[%c0_39, %c0_40, %c8_41] : memref<1x8x32xbf16, #tpu.memory_space<vmem>>, vector<1x8x8xbf16>
    %58 = vector.shape_cast %57 : vector<1x8x8xbf16> to vector<8x8xbf16>
    %cst_42 = arith.constant dense<0.000000e+00> : vector<8x8xf32>
    %59 = tpu.matmul %56, %58, %cst_42 {dimension_numbers = #tpu.dot_dimension_numbers<[1], [0], [0], [1], [0, 0, 1, 1], [], []>} : vector<8x8xbf16>, vector<8x8xbf16>, vector<8x8xf32> -> vector<8x8xf32>
    %60 = arith.addf %55, %59 : vector<8x8xf32>
    %c0_43 = arith.constant 0 : index
    %c8_44 = arith.constant 8 : index
    %61 = vector.load %arg9[%c0_43, %c8_44] : memref<8x32xf32, #tpu.memory_space<vmem>>, vector<8x8xf32>
    tpu.vector_store %arg9[%c0_43, %c8_44], %60 {strides = array<i32>} : memref<8x32xf32, #tpu.memory_space<vmem>>, vector<8x8xf32>,
    %c0_45 = arith.constant 0 : index
    %c1_46 = arith.constant 1 : index
    %62 = vector.load %arg7[%c0_45, %c1_46] : memref<8x4xf32, #tpu.memory_space<vmem>>, vector<8x1xf32>
    tpu.vector_store %arg7[%c0_45, %c1_46], %41 {strides = array<i32>} : memref<8x4xf32, #tpu.memory_space<vmem>>, vector<8x1xf32>,
    %c0_47 = arith.constant 0 : index
    %c0_48 = arith.constant 0 : index
    %c16 = arith.constant 16 : index
    %63 = vector.load %arg3[%c0_47, %c0_48, %c16] : memref<1x8x32xbf16, #tpu.memory_space<vmem>>, vector<1x8x8xbf16>
    %64 = vector.shape_cast %63 : vector<1x8x8xbf16> to vector<8x8xbf16>
    %c0_49 = arith.constant 0 : index
    %c0_50 = arith.constant 0 : index
    %c16_51 = arith.constant 16 : index
    %65 = vector.load %arg4[%c0_49, %c0_50, %c16_51] : memref<1x8x32xbf16, #tpu.memory_space<vmem>>, vector<1x8x8xbf16>
    %66 = vector.shape_cast %65 : vector<1x8x8xbf16> to vector<8x8xbf16>
    %cst_52 = arith.constant dense<0.000000e+00> : vector<8x8xf32>
    %67 = tpu.matmul %64, %66, %cst_52 {dimension_numbers = #tpu.dot_dimension_numbers<[1], [1], [0], [0], [0, 0, 1, 0], [], []>} : vector<8x8xbf16>, vector<8x8xbf16>, vector<8x8xf32> -> vector<8x8xf32>
    %c0_53 = arith.constant 0 : index
    %c2 = arith.constant 2 : index
    %68 = vector.load %arg7[%c0_53, %c2] : memref<8x4xf32, #tpu.memory_space<vmem>>, vector<8x1xf32>
    %cst_54 = arith.constant dense<0xFF800000> : vector<8xf32>
    %69 = vector.multi_reduction <maximumf>, %67, %cst_54 [1] : vector<8x8xf32> to vector<8xf32>
    %70 = vector.shape_cast %69 : vector<8xf32> to vector<8x1xf32>
    %71 = arith.maximumf %68, %70 : vector<8x1xf32>
    %72 = arith.subf %68, %71 : vector<8x1xf32>
    %73 = math.exp %72 : vector<8x1xf32>
    %74 = vector.broadcast %71 : vector<8x1xf32> to vector<8x8xf32>
    %75 = arith.subf %67, %74 : vector<8x8xf32>
    %76 = math.exp %75 : vector<8x8xf32>
    %c0_55 = arith.constant 0 : index
    %c2_56 = arith.constant 2 : index
    %77 = vector.load %arg8[%c0_55, %c2_56] : memref<8x4xf32, #tpu.memory_space<vmem>>, vector<8x1xf32>
    %78 = arith.mulf %73, %77 : vector<8x1xf32>
    %cst_57 = arith.constant dense<0.000000e+00> : vector<8xf32>
    %79 = vector.multi_reduction <add>, %76, %cst_57 [1] : vector<8x8xf32> to vector<8xf32>
    %80 = vector.shape_cast %79 : vector<8xf32> to vector<8x1xf32>
    %81 = arith.addf %78, %80 : vector<8x1xf32>
    %c0_58 = arith.constant 0 : index
    %c2_59 = arith.constant 2 : index
    %82 = vector.load %arg8[%c0_58, %c2_59] : memref<8x4xf32, #tpu.memory_space<vmem>>, vector<8x1xf32>
    tpu.vector_store %arg8[%c0_58, %c2_59], %81 {strides = array<i32>} : memref<8x4xf32, #tpu.memory_space<vmem>>, vector<8x1xf32>,
    %c0_60 = arith.constant 0 : index
    %c16_61 = arith.constant 16 : index
    %83 = vector.load %arg9[%c0_60, %c16_61] : memref<8x32xf32, #tpu.memory_space<vmem>>, vector<8x8xf32>
    %84 = vector.broadcast %73 : vector<8x1xf32> to vector<8x8xf32>
    %85 = arith.mulf %84, %83 : vector<8x8xf32>
    %86 = arith.truncf %76 : vector<8x8xf32> to vector<8x8xbf16>
    %c0_62 = arith.constant 0 : index
    %c0_63 = arith.constant 0 : index
    %c16_64 = arith.constant 16 : index
    %87 = vector.load %arg5[%c0_62, %c0_63, %c16_64] : memref<1x8x32xbf16, #tpu.memory_space<vmem>>, vector<1x8x8xbf16>
    %88 = vector.shape_cast %87 : vector<1x8x8xbf16> to vector<8x8xbf16>
    %cst_65 = arith.constant dense<0.000000e+00> : vector<8x8xf32>
    %89 = tpu.matmul %86, %88, %cst_65 {dimension_numbers = #tpu.dot_dimension_numbers<[1], [0], [0], [1], [0, 0, 1, 1], [], []>} : vector<8x8xbf16>, vector<8x8xbf16>, vector<8x8xf32> -> vector<8x8xf32>
    %90 = arith.addf %85, %89 : vector<8x8xf32>
    %c0_66 = arith.constant 0 : index
    %c16_67 = arith.constant 16 : index
    %91 = vector.load %arg9[%c0_66, %c16_67] : memref<8x32xf32, #tpu.memory_space<vmem>>, vector<8x8xf32>
    tpu.vector_store %arg9[%c0_66, %c16_67], %90 {strides = array<i32>} : memref<8x32xf32, #tpu.memory_space<vmem>>, vector<8x8xf32>,
    %c0_68 = arith.constant 0 : index
    %c2_69 = arith.constant 2 : index
    %92 = vector.load %arg7[%c0_68, %c2_69] : memref<8x4xf32, #tpu.memory_space<vmem>>, vector<8x1xf32>
    tpu.vector_store %arg7[%c0_68, %c2_69], %71 {strides = array<i32>} : memref<8x4xf32, #tpu.memory_space<vmem>>, vector<8x1xf32>,
    %c0_70 = arith.constant 0 : index
    %c0_71 = arith.constant 0 : index
    %c24 = arith.constant 24 : index
    %93 = vector.load %arg3[%c0_70, %c0_71, %c24] : memref<1x8x32xbf16, #tpu.memory_space<vmem>>, vector<1x8x8xbf16>
    %94 = vector.shape_cast %93 : vector<1x8x8xbf16> to vector<8x8xbf16>
    %c0_72 = arith.constant 0 : index
    %c0_73 = arith.constant 0 : index
    %c24_74 = arith.constant 24 : index
    %95 = vector.load %arg4[%c0_72, %c0_73, %c24_74] : memref<1x8x32xbf16, #tpu.memory_space<vmem>>, vector<1x8x8xbf16>
    %96 = vector.shape_cast %95 : vector<1x8x8xbf16> to vector<8x8xbf16>
    %cst_75 = arith.constant dense<0.000000e+00> : vector<8x8xf32>
    %97 = tpu.matmul %94, %96, %cst_75 {dimension_numbers = #tpu.dot_dimension_numbers<[1], [1], [0], [0], [0, 0, 1, 0], [], []>} : vector<8x8xbf16>, vector<8x8xbf16>, vector<8x8xf32> -> vector<8x8xf32>
    %c0_76 = arith.constant 0 : index
    %c3 = arith.constant 3 : index
    %98 = vector.load %arg7[%c0_76, %c3] : memref<8x4xf32, #tpu.memory_space<vmem>>, vector<8x1xf32>
    %cst_77 = arith.constant dense<0xFF800000> : vector<8xf32>
    %99 = vector.multi_reduction <maximumf>, %97, %cst_77 [1] : vector<8x8xf32> to vector<8xf32>
    %100 = vector.shape_cast %99 : vector<8xf32> to vector<8x1xf32>
    %101 = arith.maximumf %98, %100 : vector<8x1xf32>
    %102 = arith.subf %98, %101 : vector<8x1xf32>
    %103 = math.exp %102 : vector<8x1xf32>
    %104 = vector.broadcast %101 : vector<8x1xf32> to vector<8x8xf32>
    %105 = arith.subf %97, %104 : vector<8x8xf32>
    %106 = math.exp %105 : vector<8x8xf32>
    %c0_78 = arith.constant 0 : index
    %c3_79 = arith.constant 3 : index
    %107 = vector.load %arg8[%c0_78, %c3_79] : memref<8x4xf32, #tpu.memory_space<vmem>>, vector<8x1xf32>
    %108 = arith.mulf %103, %107 : vector<8x1xf32>
    %cst_80 = arith.constant dense<0.000000e+00> : vector<8xf32>
    %109 = vector.multi_reduction <add>, %106, %cst_80 [1] : vector<8x8xf32> to vector<8xf32>
    %110 = vector.shape_cast %109 : vector<8xf32> to vector<8x1xf32>
    %111 = arith.addf %108, %110 : vector<8x1xf32>
    %c0_81 = arith.constant 0 : index
    %c3_82 = arith.constant 3 : index
    %112 = vector.load %arg8[%c0_81, %c3_82] : memref<8x4xf32, #tpu.memory_space<vmem>>, vector<8x1xf32>
    tpu.vector_store %arg8[%c0_81, %c3_82], %111 {strides = array<i32>} : memref<8x4xf32, #tpu.memory_space<vmem>>, vector<8x1xf32>,
    %c0_83 = arith.constant 0 : index
    %c24_84 = arith.constant 24 : index
    %113 = vector.load %arg9[%c0_83, %c24_84] : memref<8x32xf32, #tpu.memory_space<vmem>>, vector<8x8xf32>
    %114 = vector.broadcast %103 : vector<8x1xf32> to vector<8x8xf32>
    %115 = arith.mulf %114, %113 : vector<8x8xf32>
    %116 = arith.truncf %106 : vector<8x8xf32> to vector<8x8xbf16>
    %c0_85 = arith.constant 0 : index
    %c0_86 = arith.constant 0 : index
    %c24_87 = arith.constant 24 : index
    %117 = vector.load %arg5[%c0_85, %c0_86, %c24_87] : memref<1x8x32xbf16, #tpu.memory_space<vmem>>, vector<1x8x8xbf16>
    %118 = vector.shape_cast %117 : vector<1x8x8xbf16> to vector<8x8xbf16>
    %cst_88 = arith.constant dense<0.000000e+00> : vector<8x8xf32>
    %119 = tpu.matmul %116, %118, %cst_88 {dimension_numbers = #tpu.dot_dimension_numbers<[1], [0], [0], [1], [0, 0, 1, 1], [], []>} : vector<8x8xbf16>, vector<8x8xbf16>, vector<8x8xf32> -> vector<8x8xf32>
    %120 = arith.addf %115, %119 : vector<8x8xf32>
    %c0_89 = arith.constant 0 : index
    %c24_90 = arith.constant 24 : index
    %121 = vector.load %arg9[%c0_89, %c24_90] : memref<8x32xf32, #tpu.memory_space<vmem>>, vector<8x8xf32>
    tpu.vector_store %arg9[%c0_89, %c24_90], %120 {strides = array<i32>} : memref<8x32xf32, #tpu.memory_space<vmem>>, vector<8x8xf32>,
    %c0_91 = arith.constant 0 : index
    %c3_92 = arith.constant 3 : index
    %122 = vector.load %arg7[%c0_91, %c3_92] : memref<8x4xf32, #tpu.memory_space<vmem>>, vector<8x1xf32>
    tpu.vector_store %arg7[%c0_91, %c3_92], %101 {strides = array<i32>} : memref<8x4xf32, #tpu.memory_space<vmem>>, vector<8x1xf32>,
    %c0_i32_93 = arith.constant 0 : i32
    %123 = arith.cmpi eq, %arg2, %c0_i32_93 : i32
    %124 = arith.extui %123 : i1 to i32
    %c0_i32_94 = arith.constant 0 : i32
    %125 = arith.cmpi ne, %124, %c0_i32_94 : i32
    scf.if %125 {
      %c0_95 = arith.constant 0 : index
      %c0_96 = arith.constant 0 : index
      %126 = vector.load %arg9[%c0_95, %c0_96] : memref<8x32xf32, #tpu.memory_space<vmem>>, vector<8x8xf32>
      %c0_97 = arith.constant 0 : index
      %c0_98 = arith.constant 0 : index
      %127 = vector.load %arg8[%c0_97, %c0_98] : memref<8x4xf32, #tpu.memory_space<vmem>>, vector<8x1xf32>
      %128 = vector.broadcast %127 : vector<8x1xf32> to vector<8x8xf32>
      %129 = arith.divf %126, %128 : vector<8x8xf32>
      %c0_99 = arith.constant 0 : index
      %c0_100 = arith.constant 0 : index
      %c0_101 = arith.constant 0 : index
      %130 = vector.load %arg6[%c0_99, %c0_100, %c0_101] : memref<1x8x32xf32, #tpu.memory_space<vmem>>, vector<1x8x8xf32>
      %131 = vector.shape_cast %130 : vector<1x8x8xf32> to vector<8x8xf32>
      %132 = vector.shape_cast %129 : vector<8x8xf32> to vector<1x8x8xf32>
      tpu.vector_store %arg6[%c0_99, %c0_100, %c0_101], %132 {strides = array<i32>} : memref<1x8x32xf32, #tpu.memory_space<vmem>>, vector<1x8x8xf32>,
      %c0_102 = arith.constant 0 : index
      %c8_103 = arith.constant 8 : index
      %133 = vector.load %arg9[%c0_102, %c8_103] : memref<8x32xf32, #tpu.memory_space<vmem>>, vector<8x8xf32>
      %c0_104 = arith.constant 0 : index
      %c1_105 = arith.constant 1 : index
      %134 = vector.load %arg8[%c0_104, %c1_105] : memref<8x4xf32, #tpu.memory_space<vmem>>, vector<8x1xf32>
      %135 = vector.broadcast %134 : vector<8x1xf32> to vector<8x8xf32>
      %136 = arith.divf %133, %135 : vector<8x8xf32>
      %c0_106 = arith.constant 0 : index
      %c0_107 = arith.constant 0 : index
      %c8_108 = arith.constant 8 : index
      %137 = vector.load %arg6[%c0_106, %c0_107, %c8_108] : memref<1x8x32xf32, #tpu.memory_space<vmem>>, vector<1x8x8xf32>
      %138 = vector.shape_cast %137 : vector<1x8x8xf32> to vector<8x8xf32>
      %139 = vector.shape_cast %136 : vector<8x8xf32> to vector<1x8x8xf32>
      tpu.vector_store %arg6[%c0_106, %c0_107, %c8_108], %139 {strides = array<i32>} : memref<1x8x32xf32, #tpu.memory_space<vmem>>, vector<1x8x8xf32>,
      %c0_109 = arith.constant 0 : index
      %c16_110 = arith.constant 16 : index
      %140 = vector.load %arg9[%c0_109, %c16_110] : memref<8x32xf32, #tpu.memory_space<vmem>>, vector<8x8xf32>
      %c0_111 = arith.constant 0 : index
      %c2_112 = arith.constant 2 : index
      %141 = vector.load %arg8[%c0_111, %c2_112] : memref<8x4xf32, #tpu.memory_space<vmem>>, vector<8x1xf32>
      %142 = vector.broadcast %141 : vector<8x1xf32> to vector<8x8xf32>
      %143 = arith.divf %140, %142 : vector<8x8xf32>
      %c0_113 = arith.constant 0 : index
      %c0_114 = arith.constant 0 : index
      %c16_115 = arith.constant 16 : index
      %144 = vector.load %arg6[%c0_113, %c0_114, %c16_115] : memref<1x8x32xf32, #tpu.memory_space<vmem>>, vector<1x8x8xf32>
      %145 = vector.shape_cast %144 : vector<1x8x8xf32> to vector<8x8xf32>
      %146 = vector.shape_cast %143 : vector<8x8xf32> to vector<1x8x8xf32>
      tpu.vector_store %arg6[%c0_113, %c0_114, %c16_115], %146 {strides = array<i32>} : memref<1x8x32xf32, #tpu.memory_space<vmem>>, vector<1x8x8xf32>,
      %c0_116 = arith.constant 0 : index
      %c24_117 = arith.constant 24 : index
      %147 = vector.load %arg9[%c0_116, %c24_117] : memref<8x32xf32, #tpu.memory_space<vmem>>, vector<8x8xf32>
      %c0_118 = arith.constant 0 : index
      %c3_119 = arith.constant 3 : index
      %148 = vector.load %arg8[%c0_118, %c3_119] : memref<8x4xf32, #tpu.memory_space<vmem>>, vector<8x1xf32>
      %149 = vector.broadcast %148 : vector<8x1xf32> to vector<8x8xf32>
      %150 = arith.divf %147, %149 : vector<8x8xf32>
      %c0_120 = arith.constant 0 : index
      %c0_121 = arith.constant 0 : index
      %c24_122 = arith.constant 24 : index
      %151 = vector.load %arg6[%c0_120, %c0_121, %c24_122] : memref<1x8x32xf32, #tpu.memory_space<vmem>>, vector<1x8x8xf32>
      %152 = vector.shape_cast %151 : vector<1x8x8xf32> to vector<8x8xf32>
      %153 = vector.shape_cast %150 : vector<8x8xf32> to vector<1x8x8xf32>
      tpu.vector_store %arg6[%c0_120, %c0_121, %c24_122], %153 {strides = array<i32>} : memref<1x8x32xf32, #tpu.memory_space<vmem>>, vector<1x8x8xf32>,
    } else {
    }
    return
  }
  func.func @transform_0(%arg0: i32, %arg1: i32, %arg2: i32) -> (i32, i32, i32) {
    %c0_i32 = arith.constant 0 : i32
    %c0_i32_0 = arith.constant 0 : i32
    return %arg0, %arg1, %c0_i32 : i32, i32, i32
  }
  func.func @transform_1(%arg0: i32, %arg1: i32, %arg2: i32) -> (i32, i32, i32) {
    %c0_i32 = arith.constant 0 : i32
    %c0_i32_0 = arith.constant 0 : i32
    return %arg0, %arg2, %c0_i32 : i32, i32, i32
  }
  func.func @transform_2(%arg0: i32, %arg1: i32, %arg2: i32) -> (i32, i32, i32) {
    %c0_i32 = arith.constant 0 : i32
    %c0_i32_0 = arith.constant 0 : i32
    return %arg0, %arg2, %c0_i32 : i32, i32, i32
  }
  func.func @transform_3(%arg0: i32, %arg1: i32, %arg2: i32) -> (i32, i32, i32) {
    %c0_i32 = arith.constant 0 : i32
    %c0_i32_0 = arith.constant 0 : i32
    return %arg0, %arg1, %c0_i32 : i32, i32, i32
  }
}

</mosaic_0001>

<llo_original>
// kernel: tpu_custom_call.1
$region0: #{tpu_custom_call.1}
  #allocation0 [shape = 'u32[]', space=smem, size = 0x4, offset = 0x4, fixed_abs, tag = 'smem constant byte address 0x4 - core index']
  #allocation1 [shape = 'u32[144,128]{1,0:T(1,128)}', space=vmem, size = 0x12000, scoped, tag = 'internal scratch']
  #allocation2 [shape = 'f32[8,4]{1,0:T(8,128)}', space=vmem, size = 0x1000, scoped, tag = 'scratch operand']
  #allocation3 [shape = 'f32[8,4]{1,0:T(8,128)}', space=vmem, size = 0x1000, scoped, tag = 'scratch operand']
  #allocation4 [shape = 'f32[8,32]{1,0:T(8,128)}', space=vmem, size = 0x1000, scoped, tag = 'scratch operand']
  %s0 = inlined_call_operand.hbm [shape: bf16[2,8,32], index: 0, kind: input, shape index: {}]
  %s1 = inlined_call_operand.hbm [shape: bf16[2,8,32], index: 1, kind: input, shape index: {}]
  %s2 = inlined_call_operand.hbm [shape: bf16[2,8,32], index: 2, kind: input, shape index: {}]
  %s3 = inlined_call_operand.hbm [shape: f32[2,8,32], index: 3, kind: output, shape index: {}]
  %s4 = sld [smem:[#allocation0]]
  $region65: #{tpu_custom_call.1} parent=0
    _
  %s6 = ssub.s32 1, %s4
  %s7 = scalar_select 0, %s6, %s4
  $region1: #{tpu_custom_call.1} parent=0
    #allocation5 [shape = 'u8[4096]{0}', space=vmem, size = 0x1000, scoped, tag = 'input window, operand 0']
    #allocation6 [shape = 's32[2]{0}', space=sflag, size = 0x8, scoped, tag = 'scoped memory for tpu_custom_call.1']
    #allocation7 [shape = 's32[2]{0}', space=sflag, size = 0x8, scoped, tag = 'scoped memory for tpu_custom_call.1']
    #allocation8 [shape = 'u8[4096]{0}', space=vmem, size = 0x1000, scoped, tag = 'input window, operand 1']
    #allocation9 [shape = 's32[2]{0}', space=sflag, size = 0x8, scoped, tag = 'scoped memory for tpu_custom_call.1']
    #allocation10 [shape = 'u8[4096]{0}', space=vmem, size = 0x1000, scoped, tag = 'input window, operand 2']
    #allocation11 [shape = 'u8[8192]{0}', space=vmem, size = 0x2000, scoped, tag = 'output window, operand 0']
    %8 = vsyncpa [#allocation6], 0
    %s9 = scalar_lea.sflag [#allocation6], 1
    %10 = vsyncpa %s9, 0
    %11 = vsyncpa [#allocation9], 0
    %s12 = scalar_lea.sflag [#allocation9], 1
    %13 = vsyncpa %s12, 0
    %14 = vsyncpa [#allocation7], 0
    %s15 = scalar_lea.sflag [#allocation7], 1
    %16 = vsyncpa %s15, 0
    loop: start=0, step=1, limit=4
    $region2: #{tpu_custom_call.1} parent=1 // loop_pre_header
      _
    $region3: #{tpu_custom_call.1} parent=1 // loop_header
      %s18 = sphi 0, %s22
      %p19 = scmp.ge.s32.totalorder %s18, 4
      %s25 = sphi 0, %s44
      %s26 = sphi 0, %s40
      %s27 = sphi 0, %s36
      %s28 = sphi 0, %s25
      %s29 = sphi 0, %s26
      %s30 = sphi 0, %s27
      %s31 = sphi 0, %s28
      %s32 = sphi 0, %s29
      %s33 = sphi 0, %s30
      %s49 = sphi 0, %s51
      %s52 = sphi 0, %s49
      %s53 = sphi 0, %s52
      %s69 = sphi 0, %s53
      %s77 = sphi 0, %s79
      %s80 = sphi 0, %s77
      %s81 = sphi 0, %s80
      %s97 = sphi 0, %s81
      %s105 = sphi 0, %s107
      %s108 = sphi 0, %s105
      %s109 = sphi 0, %s108
      %s125 = sphi 0, %s109
      %s133 = sphi 0, %s135
      %s136 = sphi 0, %s133
      %s137 = sphi 0, %s136
      %s153 = sphi 0, %s137
    $region4: #{tpu_custom_call.1} parent=1 // loop_header_branch
      %21 = sbr.rel (%p19) target = $region8
    $region5: #{tpu_custom_call.1} parent=1 // loop_body
      %s23 = ssub.s32 %s18, 1
      %s24 = ssub.s32 %s18, 2
      %s34 = sadd.s32 1, %s27
      %p35 = scmp.ge.s32.totalorder %s34, 1
      %s36 = scalar_select %p35, 0, %s34
      %s37 = sadd.s32 1, %s26
      %s38 = scalar_select %p35, %s37, %s26
      %p39 = scmp.ge.s32.totalorder %s38, 1
      %s40 = scalar_select %p39, 0, %s38
      %s41 = sadd.s32 1, %s25
      %s42 = scalar_select %p39, %s41, %s25
      %p43 = scmp.ge.s32.totalorder %s42, 2
      %s44 = scalar_select %p43, 0, %s42
      %s45 = ssub.s32 %s25, %s44
      %s46 = ssub.s32 %s26, %s40
      %s47 = sor.u32 %s45, %s46
      %p48 = scmp.eq.s32.totalorder %s47, 0
      %s50 = sadd.s32 %s49, 1
      %s51 = scalar_select %p48, %s49, %s50
      %p54 = pneg %p48
      %p55 = scmp.eq.s32.totalorder %s18, 1
      %p56 = por %p54, %p55
      %p57 = scmp.ne.s32.totalorder %s49, %s52
      %p58 = scmp.eq.s32.totalorder %s18, 0
      %p59 = por %p57, %p58
      %p60 = scmp.ne.s32.totalorder %s49, %s52
      %p61 = scmp.eq.s32.totalorder %s23, 1
      %p62 = por %p60, %p61
      %p63 = scmp.ne.s32.totalorder %s52, %s53
      %p64 = scmp.eq.s32.totalorder %s23, 0
      %p65 = por %p63, %p64
      %p66 = scmp.ne.s32.totalorder %s52, %s53
      %p67 = scmp.eq.s32.totalorder %s24, 1
      %p68 = por %p66, %p67
      %p70 = scmp.ne.s32.totalorder %s53, %s69
      %p71 = scmp.eq.s32.totalorder %s24, 0
      %p72 = por %p70, %p71
      %s73 = ssub.s32 %s25, %s44
      %s74 = ssub.s32 %s27, %s36
      %s75 = sor.u32 %s73, %s74
      %p76 = scmp.eq.s32.totalorder %s75, 0
      %s78 = sadd.s32 %s77, 1
      %s79 = scalar_select %p76, %s77, %s78
      %p82 = pneg %p76
      %p83 = scmp.eq.s32.totalorder %s18, 1
      %p84 = por %p82, %p83
      %p85 = scmp.ne.s32.totalorder %s77, %s80
      %p86 = scmp.eq.s32.totalorder %s18, 0
      %p87 = por %p85, %p86
      %p88 = scmp.ne.s32.totalorder %s77, %s80
      %p89 = scmp.eq.s32.totalorder %s23, 1
      %p90 = por %p88, %p89
      %p91 = scmp.ne.s32.totalorder %s80, %s81
      %p92 = scmp.eq.s32.totalorder %s23, 0
      %p93 = por %p91, %p92
      %p94 = scmp.ne.s32.totalorder %s80, %s81
      %p95 = scmp.eq.s32.totalorder %s24, 1
      %p96 = por %p94, %p95
      %p98 = scmp.ne.s32.totalorder %s81, %s97
      %p99 = scmp.eq.s32.totalorder %s24, 0
      %p100 = por %p98, %p99
      %s101 = ssub.s32 %s25, %s44
      %s102 = ssub.s32 %s27, %s36
      %s103 = sor.u32 %s101, %s102
      %p104 = scmp.eq.s32.totalorder %s103, 0
      %s106 = sadd.s32 %s105, 1
      %s107 = scalar_select %p104, %s105, %s106
      %p110 = pneg %p104
      %p111 = scmp.eq.s32.totalorder %s18, 1
      %p112 = por %p110, %p111
      %p113 = scmp.ne.s32.totalorder %s105, %s108
      %p114 = scmp.eq.s32.totalorder %s18, 0
      %p115 = por %p113, %p114
      %p116 = scmp.ne.s32.totalorder %s105, %s108
      %p117 = scmp.eq.s32.totalorder %s23, 1
      %p118 = por %p116, %p117
      %p119 = scmp.ne.s32.totalorder %s108, %s109
      %p120 = scmp.eq.s32.totalorder %s23, 0
      %p121 = por %p119, %p120
      %p122 = scmp.ne.s32.totalorder %s108, %s109
      %p123 = scmp.eq.s32.totalorder %s24, 1
      %p124 = por %p122, %p123
      %p126 = scmp.ne.s32.totalorder %s109, %s125
      %p127 = scmp.eq.s32.totalorder %s24, 0
      %p128 = por %p126, %p127
      %s129 = ssub.s32 %s25, %s44
      %s130 = ssub.s32 %s26, %s40
      %s131 = sor.u32 %s129, %s130
      %p132 = scmp.eq.s32.totalorder %s131, 0
      %s134 = sadd.s32 %s133, 1
      %s135 = scalar_select %p132, %s133, %s134
      %p138 = pneg %p132
      %p139 = scmp.eq.s32.totalorder %s18, 1
      %p140 = por %p138, %p139
      %p141 = scmp.ne.s32.totalorder %s133, %s136
      %p142 = scmp.eq.s32.totalorder %s18, 0
      %p143 = por %p141, %p142
      %p144 = scmp.ne.s32.totalorder %s133, %s136
      %p145 = scmp.eq.s32.totalorder %s23, 1
      %p146 = por %p144, %p145
      %p147 = scmp.ne.s32.totalorder %s136, %s137
      %p148 = scmp.eq.s32.totalorder %s23, 0
      %p149 = por %p147, %p148
      %p150 = scmp.ne.s32.totalorder %s136, %s137
      %p151 = scmp.eq.s32.totalorder %s24, 1
      %p152 = por %p150, %p151
      %p154 = scmp.ne.s32.totalorder %s137, %s153
      %p155 = scmp.eq.s32.totalorder %s24, 0
      %p156 = por %p154, %p155
      %p157 = scmp.le.s32.totalorder 1, %s18
      %p158 = scmp.lt.s32.totalorder %s18, 3
      %p159 = pnand %p157, %p158
      %p160 = pneg %p159
      // Predicated region
      $region9: #{tpu_custom_call.1} parent=5 // pred_check
        _
      $region10: #{tpu_custom_call.1} parent=5 // pred_check_branch
        %162 = sbr.rel (%p159) target = $region12
      $region11: #{tpu_custom_call.1} parent=5 // pred_region
        %s163 = ssub.s32 %s18, 1
      $region12: #{tpu_custom_call.1} parent=5 // pred_fallthru
        _
      %p164 = scmp.lt.s32.totalorder %s18, 2
      // Predicated region
      $region13: #{tpu_custom_call.1} parent=5 // pred_check
        %p165 = pneg %p164
      $region14: #{tpu_custom_call.1} parent=5 // pred_check_branch
        %167 = sbr.rel (%p165) target = $region16
      $region15: #{tpu_custom_call.1} parent=5 // pred_region
        // Predicated region
        $region17: #{tpu_custom_call.1} parent=15 // pred_check
          %p168 = pneg %p59
        $region18: #{tpu_custom_call.1} parent=15 // pred_check_branch
          %170 = sbr.rel (%p168) target = $region20
        $region19: #{tpu_custom_call.1} parent=15 // pred_region
          %s171 = sand.u32 %s49, 1
          %s172 = scalar_lea.sflag [#allocation6], %s171
          %s173 = sand.u32 %s49, 1
          %s174 = smul.addr %s173, 4
          %s175 = scalar_lea.vmem [#allocation5], %s174
          %s177 = ssub.s32 64, 64
          %178 = vsyncadd %s172, %s177
          %s179 = sadd.s32 %s26, %s25
          %s180 = smul.addr %s179, 64
          %s181 = scalar_lea.hbm %s0, %s180
          %s183 = sshll.u32 %s175, 4
          %s184 = int_to_ptr.vmem [resolvable:$true] %s183
          %186 = dma.hbm_to_vmem [thread:$0]  %s181, 64, %s184, %s172
        $region20: #{tpu_custom_call.1} parent=15 // pred_fallthru
          _
        // Predicated region
        $region21: #{tpu_custom_call.1} parent=15 // pred_check
          %p187 = pneg %p87
        $region22: #{tpu_custom_call.1} parent=15 // pred_check_branch
          %189 = sbr.rel (%p187) target = $region24
        $region23: #{tpu_custom_call.1} parent=15 // pred_region
          %s190 = sand.u32 %s18, 1
          %s191 = scalar_lea.sflag [#allocation9], %s190
          %s192 = sand.u32 %s77, 1
          %s193 = smul.addr %s192, 4
          %s194 = scalar_lea.vmem [#allocation8], %s193
          %s196 = ssub.s32 64, 64
          %197 = vsyncadd %s191, %s196
          %s198 = sadd.s32 %s27, %s25
          %s199 = smul.addr %s198, 64
          %s200 = scalar_lea.hbm %s1, %s199
          %s202 = sshll.u32 %s194, 4
          %s203 = int_to_ptr.vmem [resolvable:$true] %s202
          %205 = dma.hbm_to_vmem [thread:$0]  %s200, 64, %s203, %s191
        $region24: #{tpu_custom_call.1} parent=15 // pred_fallthru
          _
        // Predicated region
        $region25: #{tpu_custom_call.1} parent=15 // pred_check
          %p206 = pneg %p115
        $region26: #{tpu_custom_call.1} parent=15 // pred_check_branch
          %208 = sbr.rel (%p206) target = $region28
        $region27: #{tpu_custom_call.1} parent=15 // pred_region
          %s209 = sand.u32 %s18, 1
          %s210 = scalar_lea.sflag [#allocation9], %s209
          %s211 = sand.u32 %s105, 1
          %s212 = smul.addr %s211, 4
          %s213 = scalar_lea.vmem [#allocation10], %s212
          %s215 = ssub.s32 64, 64
          %216 = vsyncadd %s210, %s215
          %s217 = sadd.s32 %s27, %s25
          %s218 = smul.addr %s217, 64
          %s219 = scalar_lea.hbm %s2, %s218
          %s221 = sshll.u32 %s213, 4
          %s222 = int_to_ptr.vmem [resolvable:$true] %s221
          %224 = dma.hbm_to_vmem [thread:$0]  %s219, 64, %s222, %s210
        $region28: #{tpu_custom_call.1} parent=15 // pred_fallthru
          _
      $region16: #{tpu_custom_call.1} parent=5 // pred_fallthru
        _
      %p225 = scmp.le.s32.totalorder 1, %s18
      %p226 = scmp.lt.s32.totalorder %s18, 3
      %p227 = pnand %p225, %p226
      %p228 = pneg %p227
      // Predicated region
      $region29: #{tpu_custom_call.1} parent=5 // pred_check
        _
      $region30: #{tpu_custom_call.1} parent=5 // pred_check_branch
        %230 = sbr.rel (%p227) target = $region32
      $region31: #{tpu_custom_call.1} parent=5 // pred_region
        %s231 = ssub.s32 %s18, 1
        %s232 = sand.u32 %s52, 1
        %s233 = scalar_lea.sflag [#allocation6], %s232
        %s234 = sand.u32 %s52, 1
        %s235 = smul.addr %s234, 4
        %s236 = scalar_lea.vmem [#allocation5], %s235
        // Predicated region
        $region33: #{tpu_custom_call.1} parent=31 // pred_check
          %p237 = pneg %p65
        $region34: #{tpu_custom_call.1} parent=31 // pred_check_branch
          %239 = sbr.rel (%p237) target = $region36
        $region35: #{tpu_custom_call.1} parent=31 // pred_region
          %240 = dma.done %s233, 64
        $region36: #{tpu_custom_call.1} parent=31 // pred_fallthru
          _
        %s241 = sand.u32 %s23, 1
        %s242 = scalar_lea.sflag [#allocation9], %s241
        %s243 = sand.u32 %s80, 1
        %s244 = smul.addr %s243, 4
        %s245 = scalar_lea.vmem [#allocation8], %s244
        // Predicated region
        $region37: #{tpu_custom_call.1} parent=31 // pred_check
          %p246 = pneg %p93
        $region38: #{tpu_custom_call.1} parent=31 // pred_check_branch
          %248 = sbr.rel (%p246) target = $region40
        $region39: #{tpu_custom_call.1} parent=31 // pred_region
          %249 = dma.done %s242, 64
        $region40: #{tpu_custom_call.1} parent=31 // pred_fallthru
          _
        %s250 = sand.u32 %s23, 1
        %s251 = scalar_lea.sflag [#allocation9], %s250
        %s252 = sand.u32 %s108, 1
        %s253 = smul.addr %s252, 4
        %s254 = scalar_lea.vmem [#allocation10], %s253
        // Predicated region
        $region41: #{tpu_custom_call.1} parent=31 // pred_check
          %p255 = pneg %p121
        $region42: #{tpu_custom_call.1} parent=31 // pred_check_branch
          %257 = sbr.rel (%p255) target = $region44
        $region43: #{tpu_custom_call.1} parent=31 // pred_region
          %258 = dma.done %s251, 64
        $region44: #{tpu_custom_call.1} parent=31 // pred_fallthru
          _
        %s259 = sand.u32 %s52, 1
        %s260 = scalar_lea.sflag [#allocation6], %s259
        %s261 = sand.u32 %s52, 1
        %s262 = smul.addr %s261, 4
        %s263 = scalar_lea.vmem [#allocation5], %s262
        %p264 = pneg %p65
        %p265 = pneg %p62
        %s266 = sand.u32 %s23, 1
        %s267 = scalar_lea.sflag [#allocation9], %s266
        %s268 = sand.u32 %s80, 1
        %s269 = smul.addr %s268, 4
        %s270 = scalar_lea.vmem [#allocation8], %s269
        %p271 = pneg %p93
        %p272 = pneg %p90
        %s273 = sand.u32 %s23, 1
        %s274 = scalar_lea.sflag [#allocation9], %s273
        %s275 = sand.u32 %s108, 1
        %s276 = smul.addr %s275, 4
        %s277 = scalar_lea.vmem [#allocation10], %s276
        %p278 = pneg %p121
        %p279 = pneg %p118
        %p280 = pneg %p149
        %p281 = pneg %p146
        %s282 = sand.u32 %s136, 1
        %s283 = scalar_lea.sflag [#allocation7], %s282
        %s284 = sand.u32 %s136, 1
        %s285 = smul.addr %s284, 8
        %s286 = scalar_lea.vmem [#allocation11], %s285
        %p288 = scmp.eq.s32.totalorder %s30, 0
        // Predicated region
        $region45: #{tpu_custom_call.1} parent=31 // pred_check
          %p289 = pneg %p288
        $region46: #{tpu_custom_call.1} parent=31 // pred_check_branch
          %291 = sbr.rel (%p289) target = $region48
        $region47: #{tpu_custom_call.1} parent=31 // pred_region
          %vm292 = vcmask 31744
          %293 = vst.msk [vmem:[#allocation2] sm:$0xff] %vm292, -inf
          %294 = vst.msk [vmem:[#allocation3] sm:$0xff] %vm292, 0.0
          %vm295 = vcmask 261120
          %296 = vst.msk [vmem:[#allocation4] sm:$0xff] %vm295, 0.0
        $region48: #{tpu_custom_call.1} parent=31 // pred_fallthru
          _
        %v297 = vld [vmem:[%s236] sm:$0xf]
        %v298 = vld [vmem:[%s245] sm:$0xf]
        %vm299 = vcmask 64512
        %v301 = vsel %vm299, %v297, 0
        %v304 = vsel %vm299, %v298, 0
        %306 = vmatprep.subr.bf16.mxu0 0
        %307 = vmatpush1.bf16.xpose.msra.mxu0 %v304
        %308 = vmatprep.subr.bf16.mxu0 0
        %309 = vmatpush1.bf16.xpose.msra.mxu0 0
        %310 = vmatprep.subr.bf16.mxu0 0
        %311 = vmatpush1.bf16.xpose.msra.mxu0 0
        %312 = vmatprep.subr.bf16.mxu0 0
        %313 = vmatpush1.bf16.xpose.msra.mxu0 0
        %314 = vmatprep.subr.bf16.mxu0 0
        %315 = vmatpush1.bf16.xpose.msra.mxu0 0
        %316 = vmatprep.subr.bf16.mxu0 0
        %317 = vmatpush1.bf16.xpose.msra.mxu0 0
        %318 = vmatprep.subr.bf16.mxu0 0
        %319 = vmatpush1.bf16.xpose.msra.mxu0 0
        %320 = vmatprep.subr.bf16.mxu0 0
        %321 = vmatpush1.bf16.xpose.msra.mxu0 0
        %322 = vmatprep.subr.bf16.mxu0 0
        %323 = vmatpush1.bf16.xpose.msra.mxu0 0
        %324 = vmatprep.subr.bf16.mxu0 0
        %325 = vmatpush1.bf16.xpose.msra.mxu0 0
        %326 = vmatprep.subr.bf16.mxu0 0
        %327 = vmatpush1.bf16.xpose.msra.mxu0 0
        %328 = vmatprep.subr.bf16.mxu0 0
        %329 = vmatpush1.bf16.xpose.msra.mxu0 0
        %330 = vmatprep.subr.bf16.mxu0 0
        %331 = vmatpush1.bf16.xpose.msra.mxu0 0
        %332 = vmatprep.subr.bf16.mxu0 0
        %333 = vmatpush1.bf16.xpose.msra.mxu0 0
        %334 = vmatprep.subr.bf16.mxu0 0
        %335 = vmatpush1.bf16.xpose.msra.mxu0 0
        %336 = vmatprep.subr.bf16.mxu0 0
        %337 = vmatpush1.bf16.xpose.msra.mxu0 0
        %338 = vmatprep.mubr.bf16.mxu0 0
        %339 = vmatmul.mubr.bf16.gmra.mrb[0].mxu0 %v301
        %v340 = vpop.f32.mrb[0].mxu0
        %v341 = vadd.f32 0.0, %v340
        %v342 = vpop.f32.mrb[0].mxu0
        %v343 = vpop.f32.mrb[0].mxu0
        %v344 = vpop.f32.mrb[0].mxu0
        %345 = vdwg.mxu0
        %v346 = vld [vmem:[#allocation2] sm:$0xff]
        %v347 = vsel %vm299, %v341, -inf
        %348 = vmax.xlane.f32.xlu0 %v347
        %v349 = vpop.xlane.xlu0 %348
        %v350 = vmax.f32 %v346, %v349
        %v351 = vsub.f32 %v346, %v350
        %v352 = vmul.f32 %v351, 1.442695
        %v353 = vpow.pop %v352
        %355 = vset.pattern.permute.xlu0 0
        %356 = vperm.xlu0 %355, %v350
        %v357 = vpop.permute.xlu0 %356
        %v359 = vsub.f32 %v341, %v357
        %v360 = vmul.f32 %v359, 1.442695
        %v361 = vpow.pop %v360
        %v362 = vld [vmem:[#allocation3] sm:$0xff]
        %v363 = vmul.f32 %v353, %v362
        %v364 = vsel %vm299, %v361, 0.0
        %365 = vadd.xlane.f32.xlu0 %v364
        %v366 = vpop.xlane.xlu0 %365
        %v367 = vadd.f32 %v363, %v366
        %vm368 = vcmask 7168
        %369 = vst.msk [vmem:[#allocation3] sm:$0xff] %vm368, %v367
        %v370 = vld [vmem:[#allocation4] sm:$0xff]
        %372 = vset.pattern.permute.xlu0 0
        %373 = vperm.xlu0 %372, %v353
        %v374 = vpop.permute.xlu0 %373
        %v376 = vmul.f32 %v374, %v370
        %v377 = vpack.c.bf16 %v361, %v361
        %v378 = vld [vmem:[%s254] sm:$0xf]
        %v380 = vsel %vm299, %v377, 0
        %vm382 = vcmask 1043456
        %v384 = vsel %vm382, %v378, 0
        %386 = vmatprep.subr.bf16.mxu0 0
        %387 = vmatpush1.bf16.msra.mxu0 %v384
        %388 = vmatprep.subr.bf16.mxu0 0
        %389 = vmatpush1.bf16.msra.mxu0 0
        %390 = vmatprep.subr.bf16.mxu0 0
        %391 = vmatpush1.bf16.msra.mxu0 0
        %392 = vmatprep.subr.bf16.mxu0 0
        %393 = vmatpush1.bf16.msra.mxu0 0
        %394 = vmatprep.subr.bf16.mxu0 0
        %395 = vmatpush1.bf16.msra.mxu0 0
        %396 = vmatprep.subr.bf16.mxu0 0
        %397 = vmatpush1.bf16.msra.mxu0 0
        %398 = vmatprep.subr.bf16.mxu0 0
        %399 = vmatpush1.bf16.msra.mxu0 0
        %400 = vmatprep.subr.bf16.mxu0 0
        %401 = vmatpush1.bf16.msra.mxu0 0
        %402 = vmatprep.subr.bf16.mxu0 0
        %403 = vmatpush1.bf16.msra.mxu0 0
        %404 = vmatprep.subr.bf16.mxu0 0
        %405 = vmatpush1.bf16.msra.mxu0 0
        %406 = vmatprep.subr.bf16.mxu0 0
        %407 = vmatpush1.bf16.msra.mxu0 0
        %408 = vmatprep.subr.bf16.mxu0 0
        %409 = vmatpush1.bf16.msra.mxu0 0
        %410 = vmatprep.subr.bf16.mxu0 0
        %411 = vmatpush1.bf16.msra.mxu0 0
        %412 = vmatprep.subr.bf16.mxu0 0
        %413 = vmatpush1.bf16.msra.mxu0 0
        %414 = vmatprep.subr.bf16.mxu0 0
        %415 = vmatpush1.bf16.msra.mxu0 0
        %416 = vmatprep.subr.bf16.mxu0 0
        %417 = vmatpush1.bf16.msra.mxu0 0
        %418 = vmatprep.mubr.bf16.mxu0 0
        %419 = vmatmul.mubr.bf16.gmra.mrb[0].mxu0 %v380
        %v420 = vpop.f32.mrb[0].mxu0
        %v421 = vadd.f32 0.0, %v420
        %v422 = vpop.f32.mrb[0].mxu0
        %v423 = vpop.f32.mrb[0].mxu0
        %v424 = vpop.f32.mrb[0].mxu0
        %425 = vdwg.mxu0
        %v426 = vadd.f32 %v376, %v421
        %427 = vst.msk [vmem:[#allocation4] sm:$0xff] %vm299, %v426
        %428 = vst.msk [vmem:[#allocation2] sm:$0xff] %vm368, %v350
        %v429 = vld [vmem:[%s236] sm:$0xf]
        %v430 = vld [vmem:[%s245] sm:$0xf]
        %v432 = vunpack.c.l.b16 %v429
        %v433 = vpack.c.b16 %v432, %v432
        %434 = vrot.lane.b32.xlu0 %v433, 120
        %v435 = vpop.permute.xlu0 %434
        %v437 = vunpack.c.l.b16 %v430
        %v438 = vpack.c.b16 %v437, %v437
        %439 = vrot.lane.b32.xlu0 %v438, 120
        %v440 = vpop.permute.xlu0 %439
        %v442 = vsel %vm299, %v435, 0
        %v445 = vsel %vm299, %v440, 0
        %447 = vmatprep.subr.bf16.mxu0 0
        %448 = vmatpush1.bf16.xpose.msra.mxu0 %v445
        %449 = vmatprep.subr.bf16.mxu0 0
        %450 = vmatpush1.bf16.xpose.msra.mxu0 0
        %451 = vmatprep.subr.bf16.mxu0 0
        %452 = vmatpush1.bf16.xpose.msra.mxu0 0
        %453 = vmatprep.subr.bf16.mxu0 0
        %454 = vmatpush1.bf16.xpose.msra.mxu0 0
        %455 = vmatprep.subr.bf16.mxu0 0
        %456 = vmatpush1.bf16.xpose.msra.mxu0 0
        %457 = vmatprep.subr.bf16.mxu0 0
        %458 = vmatpush1.bf16.xpose.msra.mxu0 0
        %459 = vmatprep.subr.bf16.mxu0 0
        %460 = vmatpush1.bf16.xpose.msra.mxu0 0
        %461 = vmatprep.subr.bf16.mxu0 0
        %462 = vmatpush1.bf16.xpose.msra.mxu0 0
        %463 = vmatprep.subr.bf16.mxu0 0
        %464 = vmatpush1.bf16.xpose.msra.mxu0 0
        %465 = vmatprep.subr.bf16.mxu0 0
        %466 = vmatpush1.bf16.xpose.msra.mxu0 0
        %467 = vmatprep.subr.bf16.mxu0 0
        %468 = vmatpush1.bf16.xpose.msra.mxu0 0
        %469 = vmatprep.subr.bf16.mxu0 0
        %470 = vmatpush1.bf16.xpose.msra.mxu0 0
        %471 = vmatprep.subr.bf16.mxu0 0
        %472 = vmatpush1.bf16.xpose.msra.mxu0 0
        %473 = vmatprep.subr.bf16.mxu0 0
        %474 = vmatpush1.bf16.xpose.msra.mxu0 0
        %475 = vmatprep.subr.bf16.mxu0 0
        %476 = vmatpush1.bf16.xpose.msra.mxu0 0
        %477 = vmatprep.subr.bf16.mxu0 0
        %478 = vmatpush1.bf16.xpose.msra.mxu0 0
        %479 = vmatprep.mubr.bf16.mxu0 0
        %480 = vmatmul.mubr.bf16.gmra.mrb[0].mxu0 %v442
        %v481 = vpop.f32.mrb[0].mxu0
        %v482 = vadd.f32 0.0, %v481
        %v483 = vpop.f32.mrb[0].mxu0
        %v484 = vpop.f32.mrb[0].mxu0
        %v485 = vpop.f32.mrb[0].mxu0
        %486 = vdwg.mxu0
        %v487 = vld [vmem:[#allocation2] sm:$0xff]
        %v488 = vsel %vm299, %v482, -inf
        %489 = vmax.xlane.f32.xlu0 %v488
        %v490 = vpop.xlane.xlu0 %489
        %v491 = vmax.f32 %v487, %v490
        %v492 = vsub.f32 %v487, %v491
        %v493 = vmul.f32 %v492, 1.442695
        %v494 = vpow.pop %v493
        %496 = vset.pattern.permute.xlu0 1
        %497 = vperm.xlu0 %496, %v491
        %v498 = vpop.permute.xlu0 %497
        %v500 = vsub.f32 %v482, %v498
        %v501 = vmul.f32 %v500, 1.442695
        %v502 = vpow.pop %v501
        %v503 = vld [vmem:[#allocation3] sm:$0xff]
        %v504 = vmul.f32 %v494, %v503
        %v505 = vsel %vm299, %v502, 0.0
        %506 = vadd.xlane.f32.xlu0 %v505
        %v507 = vpop.xlane.xlu0 %506
        %v508 = vadd.f32 %v504, %v507
        %vm509 = vcmask 15368
        %510 = vst.msk [vmem:[#allocation3] sm:$0xff] %vm509, %v508
        %v511 = vld [vmem:[#allocation4] sm:$0xff]
        %513 = vset.pattern.permute.xlu0 1
        %514 = vperm.xlu0 %513, %v494
        %v515 = vpop.permute.xlu0 %514
        %v517 = vmul.f32 %v515, %v511
        %v518 = vpack.c.bf16 %v502, %v502
        %v519 = vld [vmem:[%s254] sm:$0xf]
        %v521 = vunpack.c.l.b16 %v519
        %v522 = vpack.c.b16 %v521, %v521
        %523 = vrot.lane.b32.xlu0 %v522, 120
        %v524 = vpop.permute.xlu0 %523
        %v526 = vsel %vm299, %v518, 0
        %v529 = vsel %vm382, %v524, 0
        %531 = vmatprep.subr.bf16.mxu0 0
        %532 = vmatpush1.bf16.msra.mxu0 %v529
        %533 = vmatprep.subr.bf16.mxu0 0
        %534 = vmatpush1.bf16.msra.mxu0 0
        %535 = vmatprep.subr.bf16.mxu0 0
        %536 = vmatpush1.bf16.msra.mxu0 0
        %537 = vmatprep.subr.bf16.mxu0 0
        %538 = vmatpush1.bf16.msra.mxu0 0
        %539 = vmatprep.subr.bf16.mxu0 0
        %540 = vmatpush1.bf16.msra.mxu0 0
        %541 = vmatprep.subr.bf16.mxu0 0
        %542 = vmatpush1.bf16.msra.mxu0 0
        %543 = vmatprep.subr.bf16.mxu0 0
        %544 = vmatpush1.bf16.msra.mxu0 0
        %545 = vmatprep.subr.bf16.mxu0 0
        %546 = vmatpush1.bf16.msra.mxu0 0
        %547 = vmatprep.subr.bf16.mxu0 0
        %548 = vmatpush1.bf16.msra.mxu0 0
        %549 = vmatprep.subr.bf16.mxu0 0
        %550 = vmatpush1.bf16.msra.mxu0 0
        %551 = vmatprep.subr.bf16.mxu0 0
        %552 = vmatpush1.bf16.msra.mxu0 0
        %553 = vmatprep.subr.bf16.mxu0 0
        %554 = vmatpush1.bf16.msra.mxu0 0
        %555 = vmatprep.subr.bf16.mxu0 0
        %556 = vmatpush1.bf16.msra.mxu0 0
        %557 = vmatprep.subr.bf16.mxu0 0
        %558 = vmatpush1.bf16.msra.mxu0 0
        %559 = vmatprep.subr.bf16.mxu0 0
        %560 = vmatpush1.bf16.msra.mxu0 0
        %561 = vmatprep.subr.bf16.mxu0 0
        %562 = vmatpush1.bf16.msra.mxu0 0
        %563 = vmatprep.mubr.bf16.mxu0 0
        %564 = vmatmul.mubr.bf16.gmra.mrb[0].mxu0 %v526
        %v565 = vpop.f32.mrb[0].mxu0
        %v566 = vadd.f32 0.0, %v565
        %v567 = vpop.f32.mrb[0].mxu0
        %v568 = vpop.f32.mrb[0].mxu0
        %v569 = vpop.f32.mrb[0].mxu0
        %570 = vdwg.mxu0
        %572 = vrot.lane.b32.xlu0 %v566, 8
        %v573 = vpop.permute.xlu0 %572
        %v575 = vadd.f32 %v517, %v573
        %vm576 = vcmask 130112
        %577 = vst.msk [vmem:[#allocation4] sm:$0xff] %vm576, %v575
        %578 = vst.msk [vmem:[#allocation2] sm:$0xff] %vm509, %v491
        %v579 = vld [vmem:[%s236] sm:$0xf]
        %v580 = vld [vmem:[%s245] sm:$0xf]
        %v582 = vunpack.c.l.b16 %v579
        %v583 = vpack.c.b16 %v582, %v582
        %584 = vrot.lane.b32.xlu0 %v583, 112
        %v585 = vpop.permute.xlu0 %584
        %v587 = vunpack.c.l.b16 %v580
        %v588 = vpack.c.b16 %v587, %v587
        %589 = vrot.lane.b32.xlu0 %v588, 112
        %v590 = vpop.permute.xlu0 %589
        %v592 = vsel %vm299, %v585, 0
        %v595 = vsel %vm299, %v590, 0
        %597 = vmatprep.subr.bf16.mxu0 0
        %598 = vmatpush1.bf16.xpose.msra.mxu0 %v595
        %599 = vmatprep.subr.bf16.mxu0 0
        %600 = vmatpush1.bf16.xpose.msra.mxu0 0
        %601 = vmatprep.subr.bf16.mxu0 0
        %602 = vmatpush1.bf16.xpose.msra.mxu0 0
        %603 = vmatprep.subr.bf16.mxu0 0
        %604 = vmatpush1.bf16.xpose.msra.mxu0 0
        %605 = vmatprep.subr.bf16.mxu0 0
        %606 = vmatpush1.bf16.xpose.msra.mxu0 0
        %607 = vmatprep.subr.bf16.mxu0 0
        %608 = vmatpush1.bf16.xpose.msra.mxu0 0
        %609 = vmatprep.subr.bf16.mxu0 0
        %610 = vmatpush1.bf16.xpose.msra.mxu0 0
        %611 = vmatprep.subr.bf16.mxu0 0
        %612 = vmatpush1.bf16.xpose.msra.mxu0 0
        %613 = vmatprep.subr.bf16.mxu0 0
        %614 = vmatpush1.bf16.xpose.msra.mxu0 0
        %615 = vmatprep.subr.bf16.mxu0 0
        %616 = vmatpush1.bf16.xpose.msra.mxu0 0
        %617 = vmatprep.subr.bf16.mxu0 0
        %618 = vmatpush1.bf16.xpose.msra.mxu0 0
        %619 = vmatprep.subr.bf16.mxu0 0
        %620 = vmatpush1.bf16.xpose.msra.mxu0 0
        %621 = vmatprep.subr.bf16.mxu0 0
        %622 = vmatpush1.bf16.xpose.msra.mxu0 0
        %623 = vmatprep.subr.bf16.mxu0 0
        %624 = vmatpush1.bf16.xpose.msra.mxu0 0
        %625 = vmatprep.subr.bf16.mxu0 0
        %626 = vmatpush1.bf16.xpose.msra.mxu0 0
        %627 = vmatprep.subr.bf16.mxu0 0
        %628 = vmatpush1.bf16.xpose.msra.mxu0 0
        %629 = vmatprep.mubr.bf16.mxu0 0
        %630 = vmatmul.mubr.bf16.gmra.mrb[0].mxu0 %v592
        %v631 = vpop.f32.mrb[0].mxu0
        %v632 = vadd.f32 0.0, %v631
        %v633 = vpop.f32.mrb[0].mxu0
        %v634 = vpop.f32.mrb[0].mxu0
        %v635 = vpop.f32.mrb[0].mxu0
        %636 = vdwg.mxu0
        %v637 = vld [vmem:[#allocation2] sm:$0xff]
        %v638 = vsel %vm299, %v632, -inf
        %639 = vmax.xlane.f32.xlu0 %v638
        %v640 = vpop.xlane.xlu0 %639
        %v641 = vmax.f32 %v637, %v640
        %v642 = vsub.f32 %v637, %v641
        %v643 = vmul.f32 %v642, 1.442695
        %v644 = vpow.pop %v643
        %646 = vset.pattern.permute.xlu0 2
        %647 = vperm.xlu0 %646, %v641
        %v648 = vpop.permute.xlu0 %647
        %v650 = vsub.f32 %v632, %v648
        %v651 = vmul.f32 %v650, 1.442695
        %v652 = vpow.pop %v651
        %v653 = vld [vmem:[#allocation3] sm:$0xff]
        %v654 = vmul.f32 %v644, %v653
        %v655 = vsel %vm299, %v652, 0.0
        %656 = vadd.xlane.f32.xlu0 %v655
        %v657 = vpop.xlane.xlu0 %656
        %v658 = vadd.f32 %v654, %v657
        %vm659 = vcmask 23568
        %660 = vst.msk [vmem:[#allocation3] sm:$0xff] %vm659, %v658
        %v661 = vld [vmem:[#allocation4] sm:$0xff]
        %663 = vset.pattern.permute.xlu0 2
        %664 = vperm.xlu0 %663, %v644
        %v665 = vpop.permute.xlu0 %664
        %v667 = vmul.f32 %v665, %v661
        %v668 = vpack.c.bf16 %v652, %v652
        %v669 = vld [vmem:[%s254] sm:$0xf]
        %v671 = vunpack.c.l.b16 %v669
        %v672 = vpack.c.b16 %v671, %v671
        %673 = vrot.lane.b32.xlu0 %v672, 112
        %v674 = vpop.permute.xlu0 %673
        %v676 = vsel %vm299, %v668, 0
        %v679 = vsel %vm382, %v674, 0
        %681 = vmatprep.subr.bf16.mxu0 0
        %682 = vmatpush1.bf16.msra.mxu0 %v679
        %683 = vmatprep.subr.bf16.mxu0 0
        %684 = vmatpush1.bf16.msra.mxu0 0
        %685 = vmatprep.subr.bf16.mxu0 0
        %686 = vmatpush1.bf16.msra.mxu0 0
        %687 = vmatprep.subr.bf16.mxu0 0
        %688 = vmatpush1.bf16.msra.mxu0 0
        %689 = vmatprep.subr.bf16.mxu0 0
        %690 = vmatpush1.bf16.msra.mxu0 0
        %691 = vmatprep.subr.bf16.mxu0 0
        %692 = vmatpush1.bf16.msra.mxu0 0
        %693 = vmatprep.subr.bf16.mxu0 0
        %694 = vmatpush1.bf16.msra.mxu0 0
        %695 = vmatprep.subr.bf16.mxu0 0
        %696 = vmatpush1.bf16.msra.mxu0 0
        %697 = vmatprep.subr.bf16.mxu0 0
        %698 = vmatpush1.bf16.msra.mxu0 0
        %699 = vmatprep.subr.bf16.mxu0 0
        %700 = vmatpush1.bf16.msra.mxu0 0
        %701 = vmatprep.subr.bf16.mxu0 0
        %702 = vmatpush1.bf16.msra.mxu0 0
        %703 = vmatprep.subr.bf16.mxu0 0
        %704 = vmatpush1.bf16.msra.mxu0 0
        %705 = vmatprep.subr.bf16.mxu0 0
        %706 = vmatpush1.bf16.msra.mxu0 0
        %707 = vmatprep.subr.bf16.mxu0 0
        %708 = vmatpush1.bf16.msra.mxu0 0
        %709 = vmatprep.subr.bf16.mxu0 0
        %710 = vmatpush1.bf16.msra.mxu0 0
        %711 = vmatprep.subr.bf16.mxu0 0
        %712 = vmatpush1.bf16.msra.mxu0 0
        %713 = vmatprep.mubr.bf16.mxu0 0
        %714 = vmatmul.mubr.bf16.gmra.mrb[0].mxu0 %v676
        %v715 = vpop.f32.mrb[0].mxu0
        %v716 = vadd.f32 0.0, %v715
        %v717 = vpop.f32.mrb[0].mxu0
        %v718 = vpop.f32.mrb[0].mxu0
        %v719 = vpop.f32.mrb[0].mxu0
        %720 = vdwg.mxu0
        %722 = vrot.lane.b32.xlu0 %v716, 16
        %v723 = vpop.permute.xlu0 %722
        %v725 = vadd.f32 %v667, %v723
        %vm726 = vcmask 195712
        %727 = vst.msk [vmem:[#allocation4] sm:$0xff] %vm726, %v725
        %728 = vst.msk [vmem:[#allocation2] sm:$0xff] %vm659, %v641
        %v729 = vld [vmem:[%s236] sm:$0xf]
        %v730 = vld [vmem:[%s245] sm:$0xf]
        %v732 = vunpack.c.l.b16 %v729
        %v733 = vpack.c.b16 %v732, %v732
        %734 = vrot.lane.b32.xlu0 %v733, 104
        %v735 = vpop.permute.xlu0 %734
        %v737 = vunpack.c.l.b16 %v730
        %v738 = vpack.c.b16 %v737, %v737
        %739 = vrot.lane.b32.xlu0 %v738, 104
        %v740 = vpop.permute.xlu0 %739
        %v742 = vsel %vm299, %v735, 0
        %v745 = vsel %vm299, %v740, 0
        %747 = vmatprep.subr.bf16.mxu0 0
        %748 = vmatpush1.bf16.xpose.msra.mxu0 %v745
        %749 = vmatprep.subr.bf16.mxu0 0
        %750 = vmatpush1.bf16.xpose.msra.mxu0 0
        %751 = vmatprep.subr.bf16.mxu0 0
        %752 = vmatpush1.bf16.xpose.msra.mxu0 0
        %753 = vmatprep.subr.bf16.mxu0 0
        %754 = vmatpush1.bf16.xpose.msra.mxu0 0
        %755 = vmatprep.subr.bf16.mxu0 0
        %756 = vmatpush1.bf16.xpose.msra.mxu0 0
        %757 = vmatprep.subr.bf16.mxu0 0
        %758 = vmatpush1.bf16.xpose.msra.mxu0 0
        %759 = vmatprep.subr.bf16.mxu0 0
        %760 = vmatpush1.bf16.xpose.msra.mxu0 0
        %761 = vmatprep.subr.bf16.mxu0 0
        %762 = vmatpush1.bf16.xpose.msra.mxu0 0
        %763 = vmatprep.subr.bf16.mxu0 0
        %764 = vmatpush1.bf16.xpose.msra.mxu0 0
        %765 = vmatprep.subr.bf16.mxu0 0
        %766 = vmatpush1.bf16.xpose.msra.mxu0 0
        %767 = vmatprep.subr.bf16.mxu0 0
        %768 = vmatpush1.bf16.xpose.msra.mxu0 0
        %769 = vmatprep.subr.bf16.mxu0 0
        %770 = vmatpush1.bf16.xpose.msra.mxu0 0
        %771 = vmatprep.subr.bf16.mxu0 0
        %772 = vmatpush1.bf16.xpose.msra.mxu0 0
        %773 = vmatprep.subr.bf16.mxu0 0
        %774 = vmatpush1.bf16.xpose.msra.mxu0 0
        %775 = vmatprep.subr.bf16.mxu0 0
        %776 = vmatpush1.bf16.xpose.msra.mxu0 0
        %777 = vmatprep.subr.bf16.mxu0 0
        %778 = vmatpush1.bf16.xpose.msra.mxu0 0
        %779 = vmatprep.mubr.bf16.mxu0 0
        %780 = vmatmul.mubr.bf16.gmra.mrb[0].mxu0 %v742
        %v781 = vpop.f32.mrb[0].mxu0
        %v782 = vadd.f32 0.0, %v781
        %v783 = vpop.f32.mrb[0].mxu0
        %v784 = vpop.f32.mrb[0].mxu0
        %v785 = vpop.f32.mrb[0].mxu0
        %786 = vdwg.mxu0
        %v787 = vld [vmem:[#allocation2] sm:$0xff]
        %v788 = vsel %vm299, %v782, -inf
        %789 = vmax.xlane.f32.xlu0 %v788
        %v790 = vpop.xlane.xlu0 %789
        %v791 = vmax.f32 %v787, %v790
        %v792 = vsub.f32 %v787, %v791
        %v793 = vmul.f32 %v792, 1.442695
        %v794 = vpow.pop %v793
        %796 = vset.pattern.permute.xlu0 3
        %797 = vperm.xlu0 %796, %v791
        %v798 = vpop.permute.xlu0 %797
        %v800 = vsub.f32 %v782, %v798
        %v801 = vmul.f32 %v800, 1.442695
        %v802 = vpow.pop %v801
        %v803 = vld [vmem:[#allocation3] sm:$0xff]
        %v804 = vmul.f32 %v794, %v803
        %v805 = vsel %vm299, %v802, 0.0
        %806 = vadd.xlane.f32.xlu0 %v805
        %v807 = vpop.xlane.xlu0 %806
        %v808 = vadd.f32 %v804, %v807
        %vm809 = vcmask 31768
        %810 = vst.msk [vmem:[#allocation3] sm:$0xff] %vm809, %v808
        %v811 = vld [vmem:[#allocation4] sm:$0xff]
        %813 = vset.pattern.permute.xlu0 3
        %814 = vperm.xlu0 %813, %v794
        %v815 = vpop.permute.xlu0 %814
        %v817 = vmul.f32 %v815, %v811
        %v818 = vpack.c.bf16 %v802, %v802
        %v819 = vld [vmem:[%s254] sm:$0xf]
        %v821 = vunpack.c.l.b16 %v819
        %v822 = vpack.c.b16 %v821, %v821
        %823 = vrot.lane.b32.xlu0 %v822, 104
        %v824 = vpop.permute.xlu0 %823
        %v826 = vsel %vm299, %v818, 0
        %v829 = vsel %vm382, %v824, 0
        %831 = vmatprep.subr.bf16.mxu0 0
        %832 = vmatpush1.bf16.msra.mxu0 %v829
        %833 = vmatprep.subr.bf16.mxu0 0
        %834 = vmatpush1.bf16.msra.mxu0 0
        %835 = vmatprep.subr.bf16.mxu0 0
        %836 = vmatpush1.bf16.msra.mxu0 0
        %837 = vmatprep.subr.bf16.mxu0 0
        %838 = vmatpush1.bf16.msra.mxu0 0
        %839 = vmatprep.subr.bf16.mxu0 0
        %840 = vmatpush1.bf16.msra.mxu0 0
        %841 = vmatprep.subr.bf16.mxu0 0
        %842 = vmatpush1.bf16.msra.mxu0 0
        %843 = vmatprep.subr.bf16.mxu0 0
        %844 = vmatpush1.bf16.msra.mxu0 0
        %845 = vmatprep.subr.bf16.mxu0 0
        %846 = vmatpush1.bf16.msra.mxu0 0
        %847 = vmatprep.subr.bf16.mxu0 0
        %848 = vmatpush1.bf16.msra.mxu0 0
        %849 = vmatprep.subr.bf16.mxu0 0
        %850 = vmatpush1.bf16.msra.mxu0 0
        %851 = vmatprep.subr.bf16.mxu0 0
        %852 = vmatpush1.bf16.msra.mxu0 0
        %853 = vmatprep.subr.bf16.mxu0 0
        %854 = vmatpush1.bf16.msra.mxu0 0
        %855 = vmatprep.subr.bf16.mxu0 0
        %856 = vmatpush1.bf16.msra.mxu0 0
        %857 = vmatprep.subr.bf16.mxu0 0
        %858 = vmatpush1.bf16.msra.mxu0 0
        %859 = vmatprep.subr.bf16.mxu0 0
        %860 = vmatpush1.bf16.msra.mxu0 0
        %861 = vmatprep.subr.bf16.mxu0 0
        %862 = vmatpush1.bf16.msra.mxu0 0
        %863 = vmatprep.mubr.bf16.mxu0 0
        %864 = vmatmul.mubr.bf16.gmra.mrb[0].mxu0 %v826
        %v865 = vpop.f32.mrb[0].mxu0
        %v866 = vadd.f32 0.0, %v865
        %v867 = vpop.f32.mrb[0].mxu0
        %v868 = vpop.f32.mrb[0].mxu0
        %v869 = vpop.f32.mrb[0].mxu0
        %870 = vdwg.mxu0
        %872 = vrot.lane.b32.xlu0 %v866, 24
        %v873 = vpop.permute.xlu0 %872
        %v875 = vadd.f32 %v817, %v873
        %vm876 = vcmask 261312
        %877 = vst.msk [vmem:[#allocation4] sm:$0xff] %vm876, %v875
        %878 = vst.msk [vmem:[#allocation2] sm:$0xff] %vm809, %v791
        // Predicated region
        $region49: #{tpu_custom_call.1} parent=31 // pred_check
          %p879 = pneg %p288
        $region50: #{tpu_custom_call.1} parent=31 // pred_check_branch
          %881 = sbr.rel (%p879) target = $region52
        $region51: #{tpu_custom_call.1} parent=31 // pred_region
          %v882 = vld [vmem:[#allocation4] sm:$0xff]
          %v883 = vld [vmem:[#allocation3] sm:$0xff]
          %885 = vset.pattern.permute.xlu0 0
          %886 = vperm.xlu0 %885, %v883
          %v887 = vpop.permute.xlu0 %886
          %v889 = vrcp.pop %v887
          %v890 = vmul.f32 %v882, %v889
          %891 = vst.msk [vmem:[%s286] sm:$0xff] %vm299, %v890
          %v892 = vld [vmem:[#allocation4] sm:$0xff]
          %v893 = vld [vmem:[#allocation3] sm:$0xff]
          %895 = vset.pattern.permute.xlu0 1
          %896 = vperm.xlu0 %895, %v893
          %v897 = vpop.permute.xlu0 %896
          %v899 = vrcp.pop %v897
          %v900 = vmul.f32 %v892, %v899
          %901 = vst.msk [vmem:[%s286] sm:$0xff] %vm576, %v900
          %v902 = vld [vmem:[#allocation4] sm:$0xff]
          %v903 = vld [vmem:[#allocation3] sm:$0xff]
          %905 = vset.pattern.permute.xlu0 2
          %906 = vperm.xlu0 %905, %v903
          %v907 = vpop.permute.xlu0 %906
          %v909 = vrcp.pop %v907
          %v910 = vmul.f32 %v902, %v909
          %911 = vst.msk [vmem:[%s286] sm:$0xff] %vm726, %v910
          %v912 = vld [vmem:[#allocation4] sm:$0xff]
          %v913 = vld [vmem:[#allocation3] sm:$0xff]
          %915 = vset.pattern.permute.xlu0 3
          %916 = vperm.xlu0 %915, %v913
          %v917 = vpop.permute.xlu0 %916
          %v919 = vrcp.pop %v917
          %v920 = vmul.f32 %v912, %v919
          %921 = vst.msk [vmem:[%s286] sm:$0xff] %vm876, %v920
        $region52: #{tpu_custom_call.1} parent=31 // pred_fallthru
          _
        %s922 = sand.u32 %s136, 1
        %s923 = scalar_lea.sflag [#allocation7], %s922
        %s924 = sand.u32 %s136, 1
        %s925 = smul.addr %s924, 8
        %s926 = scalar_lea.vmem [#allocation11], %s925
        // Predicated region
        $region53: #{tpu_custom_call.1} parent=31 // pred_check
          %p927 = pneg %p146
        $region54: #{tpu_custom_call.1} parent=31 // pred_check_branch
          %929 = sbr.rel (%p927) target = $region56
        $region55: #{tpu_custom_call.1} parent=31 // pred_region
          %s931 = ssub.s32 128, 128
          %932 = vsyncadd %s923, %s931
          %s933 = sadd.s32 %s29, %s28
          %s934 = smul.addr %s933, 128
          %s935 = scalar_lea.hbm %s3, %s934
          %s937 = sshll.u32 %s926, 4
          %s938 = int_to_ptr.vmem [resolvable:$true] %s937
          %940 = dma.vmem_to_hbm [thread:$0]  %s938, 128, %s935, %s923
        $region56: #{tpu_custom_call.1} parent=31 // pred_fallthru
          _
      $region32: #{tpu_custom_call.1} parent=5 // pred_fallthru
        _
      %p941 = scmp.le.s32.totalorder 2, %s18
      // Predicated region
      $region57: #{tpu_custom_call.1} parent=5 // pred_check
        %p942 = pneg %p941
      $region58: #{tpu_custom_call.1} parent=5 // pred_check_branch
        %944 = sbr.rel (%p942) target = $region60
      $region59: #{tpu_custom_call.1} parent=5 // pred_region
        %s945 = ssub.s32 %s18, 2
        // Predicated region
        $region61: #{tpu_custom_call.1} parent=59 // pred_check
          %p946 = pneg %p152
        $region62: #{tpu_custom_call.1} parent=59 // pred_check_branch
          %948 = sbr.rel (%p946) target = $region64
        $region63: #{tpu_custom_call.1} parent=59 // pred_region
          %s949 = sand.u32 %s137, 1
          %s950 = scalar_lea.sflag [#allocation7], %s949
          %s951 = sand.u32 %s137, 1
          %s952 = smul.addr %s951, 8
          %s953 = scalar_lea.vmem [#allocation11], %s952
          %954 = dma.done %s950, 128
        $region64: #{tpu_custom_call.1} parent=59 // pred_fallthru
          _
      $region60: #{tpu_custom_call.1} parent=5 // pred_fallthru
        _
    $region6: #{tpu_custom_call.1} parent=1 // loop_footer
      %s22 = sadd.s32 1, %s18
    $region7: #{tpu_custom_call.1} parent=1 // loop_footer_branch
      %17 = sbr.rel target = $region3
    $region8: #{tpu_custom_call.1} parent=1 // loop_exit
      _
    %955 = vsyncpa [#allocation6], 1
    %s956 = scalar_lea.sflag [#allocation6], 1
    %957 = vsyncpa %s956, 1
    %958 = vsyncpa [#allocation9], 1
    %s959 = scalar_lea.sflag [#allocation9], 1
    %960 = vsyncpa %s959, 1
    %961 = vsyncpa [#allocation7], 1
    %s962 = scalar_lea.sflag [#allocation7], 1
    %963 = vsyncpa %s962, 1

</llo_original>
